<compile_context>
chip_gen: v7x
topology: tpu7x:2x2x1
jax: 0.10.0
libtpu: 0.0.40
codegen_flags: <defaults>
</compile_context>

<pallas_src>
import math

import jax
import jax.numpy as jnp
from jax.experimental import pallas as pl
from jax.experimental.pallas import tpu as pltpu


def _copy_kernel(x_ref, o_ref):
    # Pure lane-dense tile copy; the flatten itself happened (for free) in the
    # wrapper reshape.
    o_ref[...] = x_ref[...]


def _budget():
    """(target block bytes, scoped VMEM limit bytes), tuned per TPU generation."""
    vmem_cap = 128 << 20
    try:
        info = pltpu.get_tpu_info()
        cap = getattr(info, "vmem_capacity_bytes", None)
        if cap:
            vmem_cap = int(cap)
    except Exception:
        pass
    if vmem_cap <= (64 << 20):
        # v7x: 64 MiB VMEM/TC, ~3.2 TB/s HBM -> bigger blocks amortize the
        # ~0.35 us per-step overhead; 4 x 8 MiB double-buffered = 32 MiB < 48.
        return 8 << 20, 48 << 20
    # v5e / v6e: 128 MiB physical VMEM; 4 MiB blocks (16 MiB double-buffered)
    # with an explicit 32 MiB scoped limit (v5e default is only 16 MiB).
    return 4 << 20, 32 << 20


def _largest_lane_divisor(total, cap):
    """Largest C with C % 128 == 0, C | total, C <= cap.  None if 128 !| total."""
    if total % 128 != 0:
        return None
    q = total // 128
    max_mult = max(1, cap // 128)
    best = 1
    i = 1
    while i * i <= q:
        if q % i == 0:
            for m in (i, q // i):
                if m <= max_mult and m > best:
                    best = m
        i += 1
    return 128 * best


def _cap_tile(dim, base, max_elems):
    """Full extent if it fits the budget (always legal), otherwise the largest
    multiple of `base` within the budget; cdiv grid + masking handle the edge."""
    if dim <= base or dim <= max_elems:
        return dim
    return max(base, (max_elems // base) * base)


def flatten(x, *, donate_input=True):
    """Pallas equivalent of torch Flatten: (N, ...) -> (N, prod(...))."""
    n = x.shape[0]
    flat = math.prod(x.shape[1:]) if x.ndim > 1 else 1
    total = n * flat

    itemsize = jnp.dtype(x.dtype).itemsize
    sublane = max(8, 32 // max(1, itemsize))      # 8 f32, 16 bf16, 32 int8
    target_bytes, vmem_limit = _budget()

    # ---- choose the lane-dense slab the copy runs on (reshape is free) ----
    # Widest C a (sublane, C) tile allows under the budget, but keep at least
    # `sublane` rows so vregs are fully packed along sublanes.
    max_c = max(128, (target_bytes // (sublane * itemsize)) // 128 * 128)
    if total >= 128 * sublane:
        max_c = min(max_c, max(128, (total // sublane) // 128 * 128))
    C = _largest_lane_divisor(total, max_c)

    if C is not None:
        # Flat-slab path: every block is a contiguous (tile_r * C)-element HBM run.
        R = total // C
        x2 = x.reshape(R, C)
        rows_budget = max(sublane, target_bytes // (C * itemsize))
        tile_r = _cap_tile(R, sublane, rows_budget)
        grid = (pl.cdiv(R, tile_r),)
        in_specs = [pl.BlockSpec((tile_r, C), lambda i: (i, 0))]
        out_specs = pl.BlockSpec((tile_r, C), lambda i: (i, 0))
        dims = ("parallel",)
        out_2d_shape = (R, C)
    else:
        # Fallback: total not a multiple of 128.  Tile (n, flat) directly with
        # budget-capped tiles; the cdiv grid masks the edge blocks.
        x2 = x.reshape(n, flat)
        lane_budget = max(128, target_bytes // (sublane * itemsize))
        tile_c = _cap_tile(flat, 128, lane_budget)
        rows_budget = max(sublane, target_bytes // (tile_c * itemsize))
        tile_r = _cap_tile(n, sublane, rows_budget)
        grid = (pl.cdiv(n, tile_r), pl.cdiv(flat, tile_c))
        in_specs = [pl.BlockSpec((tile_r, tile_c), lambda i, j: (i, j))]
        out_specs = pl.BlockSpec((tile_r, tile_c), lambda i, j: (i, j))
        dims = ("parallel", "parallel")
        out_2d_shape = (n, flat)

    out2 = pl.pallas_call(
        _copy_kernel,
        out_shape=jax.ShapeDtypeStruct(out_2d_shape, x.dtype),
        grid_spec=pltpu.PrefetchScalarGridSpec(
            num_scalar_prefetch=0,
            grid=grid,
            in_specs=in_specs,
            out_specs=out_specs,
        ),
        compiler_params=pltpu.CompilerParams(
            dimension_semantics=dims,
            vmem_limit_bytes=vmem_limit,
        ),
        input_output_aliases={0: 0} if donate_input else {},
    )(x2)

    # Metadata-only reshape back to the torch .view(N, -1) shape.
    return out2.reshape(n, flat)


if __name__ == "__main__":
    key = jax.random.PRNGKey(0)
    # Small NCHW input consistent with a conv-style feature map.
    x = jax.random.normal(key, (2, 4, 16, 16), dtype=jnp.float32)

    flatten_jit = jax.jit(flatten)
    out = jax.block_until_ready(flatten_jit(x))

    # Reference check against plain JAX reshape (== torch .view(N, -1)).
    ref = x.reshape(x.shape[0], -1)
    assert out.shape == (2, 4 * 16 * 16), out.shape
    assert out.dtype == x.dtype
    assert jnp.array_equal(out, ref)

    print("KERNEL_OK")
</pallas_src>

<mosaic_0001>
module attributes {stable_mosaic.version = 11 : i64} {
  func.func @_copy_kernel(%arg0: i32, %arg1: memref<8x256xf32, #tpu.memory_space<vmem>>, %arg2: memref<8x256xf32, #tpu.memory_space<vmem>>) attributes {dimension_semantics = [#tpu.dimension_semantics<parallel>], iteration_bounds = array<i64: 1>, scalar_prefetch = 0 : i64, scratch_operands = 0 : i64, tpu.core_type = #tpu.core_type<tc>, window_params = [{transform_indices = @transform_0, window_bounds = array<i64: 8, 256>}, {transform_indices = @transform_1, window_bounds = array<i64: 8, 256>}]} {
    %c0 = arith.constant 0 : index
    %c0_0 = arith.constant 0 : index
    %0 = vector.load %arg1[%c0, %c0_0] : memref<8x256xf32, #tpu.memory_space<vmem>>, vector<8x256xf32>
    %c0_1 = arith.constant 0 : index
    %c0_2 = arith.constant 0 : index
    %1 = vector.load %arg2[%c0_1, %c0_2] : memref<8x256xf32, #tpu.memory_space<vmem>>, vector<8x256xf32>
    tpu.vector_store %arg2[%c0_1, %c0_2], %0 {strides = array<i32>} : memref<8x256xf32, #tpu.memory_space<vmem>>, vector<8x256xf32>,
    return
  }
  func.func @transform_0(%arg0: i32) -> (i32, i32) {
    %c0_i32 = arith.constant 0 : i32
    %c0_i32_0 = arith.constant 0 : i32
    return %arg0, %c0_i32 : i32, i32
  }
  func.func @transform_1(%arg0: i32) -> (i32, i32) {
    %c0_i32 = arith.constant 0 : i32
    %c0_i32_0 = arith.constant 0 : i32
    return %arg0, %c0_i32 : i32, i32
  }
}

</mosaic_0001>

<llo_original>
// kernel: flatten.1
$region0: #{flatten.1}
  #allocation0 [shape = 'u32[]', space=smem, size = 0x4, offset = 0x4, fixed_abs, tag = 'smem constant byte address 0x4 - core index']
  #allocation1 [shape = 'u32[144,128]{1,0:T(1,128)}', space=vmem, size = 0x12000, scoped, tag = 'internal scratch']
  %s0 = inlined_call_operand.vmem [shape: f32[8,256], index: 0, kind: input, shape index: {}, may-alias: {0,1}]
  %s1 = inlined_call_operand.vmem [shape: f32[8,256], index: 1, kind: output, shape index: {}, may-alias: {0,1}]
  %s2 = sld [smem:[#allocation0]]
  $region14: #{flatten.1} parent=0
    _
  %s4 = ssub.s32 1, %s2
  %s5 = scalar_select 0, %s4, %s2
  // Predicated region
  $region2: #{flatten.1} parent=0 // pred_check
    _
  $region3: #{flatten.1} parent=0 // pred_check_branch
    %7 = sbr.rel (0) target = $region5
  $region4: #{flatten.1} parent=0 // pred_region
    _
  $region5: #{flatten.1} parent=0 // pred_fallthru
    _
  %v8 = vld [vmem:[%s0] sm:$0xff]
  %v9 = vld [vmem:[%s0 + $0x8] sm:$0xff]
  %10 = vst [vmem:[%s1] sm:$0xff] %v8
  %11 = vst [vmem:[%s1 + $0x8] sm:$0xff] %v9
  // Predicated region
  $region6: #{flatten.1} parent=0 // pred_check
    _
  $region7: #{flatten.1} parent=0 // pred_check_branch
    %13 = sbr.rel (0) target = $region9
  $region8: #{flatten.1} parent=0 // pred_region
    _
  $region9: #{flatten.1} parent=0 // pred_fallthru
    _
  // Predicated region
  $region10: #{flatten.1} parent=0 // pred_check
    _
  $region11: #{flatten.1} parent=0 // pred_check_branch
    %15 = sbr.rel (0) target = $region13
  $region12: #{flatten.1} parent=0 // pred_region
    _
  $region13: #{flatten.1} parent=0 // pred_fallthru
    _

</llo_original>
